<compile_context>
chip_gen: v6e
topology: v6e:2x2x1
jax: 0.10.0
libtpu: 0.0.40
codegen_flags: <defaults>
</compile_context>

<pallas_src>
import jax
import jax.numpy as jnp
from jax.experimental import pallas as pl
from jax.experimental.pallas import tpu as pltpu

THRESHOLD = 1.0          # snn.Leaky default threshold
EPS = 1e-5               # BatchNorm1d default eps
VMEM_TILE_BUDGET = 20 * 1024 * 1024   # self-imposed per-call footprint budget
VMEM_LIMIT_BYTES = 32 * 1024 * 1024   # explicit scoped-VMEM limit (safe on all gens)


# -----------------------------------------------------------------------------
# Kernel
# -----------------------------------------------------------------------------
def snn_kernel(x_ref, w1_ref, t1_ref, w2_ref, t2_ref, w3_ref, b3_ref, o_ref):
    x = x_ref[...]

    # fc1 + bn1 fully folded into (column-scaled W1, shift t1); dropout1 = identity.
    h1 = jnp.dot(x, w1_ref[...], preferred_element_type=jnp.float32) + t1_ref[...]
    # lif1 with zero-init membrane: mem_new = h1; spike = heaviside(mem_new - threshold).
    # Spikes are exactly 0/1 so casting them to the (bf16) MXU dtype is lossless.
    spk1 = (h1 > THRESHOLD).astype(w2_ref.dtype)

    # fc2 + bn2 folded; dropout2 identity.
    h2 = jnp.dot(spk1, w2_ref[...], preferred_element_type=jnp.float32) + t2_ref[...]
    spk2 = (h2 > THRESHOLD).astype(w3_ref.dtype)

    # fc3 -> unpadded (bt, out_dim) store (masked vst, but ~64x less HBM writeback than
    # a lane-padded f32 buffer + wrapper slice).
    o_ref[...] = jnp.dot(spk2, w3_ref[...], preferred_element_type=jnp.float32) + b3_ref[...]


# -----------------------------------------------------------------------------
# One-time parameter preparation (off the per-call path)
# -----------------------------------------------------------------------------
def prepare_params(params, *, mxu_dtype=jnp.bfloat16):
    """Fold BN into the Linear weights, pre-transpose, cast spike-side weights."""
    w1, b1 = params["fc1_w"], params["fc1_b"]
    w2, b2 = params["fc2_w"], params["fc2_b"]
    w3, b3 = params["fc3_w"], params["fc3_b"]
    g1, be1, m1, v1 = params["bn1_g"], params["bn1_b"], params["bn1_m"], params["bn1_v"]
    g2, be2, m2, v2 = params["bn2_g"], params["bn2_b"], params["bn2_m"], params["bn2_v"]

    # BN (inference, running stats) as per-feature scale/shift folded into the weights:
    #   (x@W^T + b - m) * s + be  ==  x @ (W^T * s) + ((b - m) * s + be)
    s1 = g1 / jnp.sqrt(v1 + EPS)
    s2 = g2 / jnp.sqrt(v2 + EPS)
    w1f = (w1.T * s1[None, :]).astype(jnp.float32)            # [in, h1], column-scaled
    t1f = ((b1 - m1) * s1 + be1).reshape(1, -1).astype(jnp.float32)
    w2f = (w2.T * s2[None, :]).astype(mxu_dtype)               # [h1, h2]
    t2f = ((b2 - m2) * s2 + be2).reshape(1, -1).astype(jnp.float32)
    w3t = w3.T.astype(mxu_dtype)                               # [h2, out_dim] (unpadded)
    b3f = b3.reshape(1, -1).astype(jnp.float32)                # [1, out_dim]

    return {"w1": w1f, "t1": t1f, "w2": w2f, "t2": t2f, "w3": w3t, "b3": b3f}


# -----------------------------------------------------------------------------
# Tile selection (VMEM-budget driven)
# -----------------------------------------------------------------------------
def _round_up(v, m):
    return ((v + m - 1) // m) * m


def _lane(d):
    return _round_up(max(int(d), 1), 128)


def _vmem_tile_bytes(bt, in_dim, h1, h2, out_dim):
    """Conservative lane-padded VMEM estimate for one grid step (double-buffered I/O)."""
    xb = bt * _lane(in_dim) * 4 * 2                    # x block
    ob = bt * _lane(out_dim) * 4 * 2                   # out block
    wb = (_lane(h1) * (in_dim + 8) * 4                 # w1 + t1 (f32)
          + _lane(h2) * (h1 + 8) * 2 + _lane(h2) * 8 * 4   # w2 (bf16) + t2 (f32)
          + _lane(out_dim) * (h2 + 8) * 4) * 2         # w3 + b3 (over-estimate as f32)
    inter = bt * (_lane(h1) * 4 + _lane(h1) * 2        # h1 (f32) + spk1 (bf16)
                  + _lane(h2) * 4 + _lane(h2) * 2)     # h2 (f32) + spk2 (bf16)
    return xb + ob + wb + inter


def _choose_batch_tile(batch, in_dim, h1, h2, out_dim, cap=4096,
                       budget=VMEM_TILE_BUDGET):
    """Multiple of 8, >=4 grid steps when the batch allows it (>=2 per v7x core),
    capped at 4096 rows and shrunk until the lane-padded VMEM estimate fits `budget`."""
    target = max(min(batch // 4, cap), 8)
    tile = max((target // 8) * 8, 8)
    while tile > 8 and _vmem_tile_bytes(tile, in_dim, h1, h2, out_dim) > budget:
        tile = max(((tile // 2) // 8) * 8, 8)
    return tile


# -----------------------------------------------------------------------------
# Wrapper
# -----------------------------------------------------------------------------
def modified_traffic_snn(x, prepared, *, batch_tile=None):
    """Fused SNN forward. `prepared` comes from prepare_params() (computed once)."""
    B, in_dim = x.shape
    w1, t1 = prepared["w1"], prepared["t1"]
    w2, t2 = prepared["w2"], prepared["t2"]
    w3, b3 = prepared["w3"], prepared["b3"]
    h1_dim, h2_dim = w1.shape[1], w2.shape[1]
    out_dim = w3.shape[1]

    if batch_tile is None:
        batch_tile = _choose_batch_tile(B, in_dim, h1_dim, h2_dim, out_dim)
    assert batch_tile % 8 == 0, "batch_tile must be a multiple of 8 (f32 sublane)"

    # Pad the batch up to a multiple of the tile (zero rows, sliced off below) so odd
    # batch sizes keep the tiled / double-buffered / megacore-split path.
    num_blocks = -(-B // batch_tile)
    B_pad = num_blocks * batch_tile
    xin = x.astype(jnp.float32)
    if B_pad != B:
        xin = jnp.pad(xin, ((0, B_pad - B), (0, 0)))

    const = lambda shape: pl.BlockSpec(shape, lambda i: (0, 0))  # grid-invariant operand

    out = pl.pallas_call(
        snn_kernel,
        out_shape=jax.ShapeDtypeStruct((B_pad, out_dim), jnp.float32),
        grid_spec=pltpu.PrefetchScalarGridSpec(
            num_scalar_prefetch=0,
            grid=(num_blocks,),
            in_specs=[
                pl.BlockSpec((batch_tile, in_dim), lambda i: (i, 0)),  # x   [bt, in]
                const((in_dim, h1_dim)),                               # W1' (BN-folded, f32)
                const((1, h1_dim)),                                    # shift1
                const((h1_dim, h2_dim)),                               # W2' (BN-folded, bf16)
                const((1, h2_dim)),                                    # shift2
                const((h2_dim, out_dim)),                              # W3^T (bf16, unpadded)
                const((1, out_dim)),                                   # b3
            ],
            out_specs=pl.BlockSpec((batch_tile, out_dim), lambda i: (i, 0)),
        ),
        compiler_params=pltpu.CompilerParams(
            dimension_semantics=("parallel",),
            vmem_limit_bytes=VMEM_LIMIT_BYTES,
        ),
    )(xin, w1, t1, w2, t2, w3, b3)

    return out[:B] if B_pad != B else out


# -----------------------------------------------------------------------------
# Parameter init + pure-JAX references
# -----------------------------------------------------------------------------
def init_params(key, input_dim, hidden_dim1, hidden_dim2, output_dim):
    ks = jax.random.split(key, 12)

    def kaiming(k, fan_out, fan_in, gain):
        std = gain / jnp.sqrt(fan_in)
        return std * jax.random.normal(k, (fan_out, fan_in), jnp.float32)

    def lin_bias(k, fan_out, fan_in):
        bound = 1.0 / jnp.sqrt(fan_in)
        return jax.random.uniform(k, (fan_out,), jnp.float32, -bound, bound)

    return {
        # kaiming_normal_ with nonlinearity='relu' -> gain sqrt(2); 'linear' -> gain 1
        "fc1_w": kaiming(ks[0], hidden_dim1, input_dim, jnp.sqrt(2.0)),
        "fc1_b": lin_bias(ks[1], hidden_dim1, input_dim),
        "fc2_w": kaiming(ks[2], hidden_dim2, hidden_dim1, jnp.sqrt(2.0)),
        "fc2_b": lin_bias(ks[3], hidden_dim2, hidden_dim1),
        "fc3_w": kaiming(ks[4], output_dim, hidden_dim2, 1.0),
        "fc3_b": lin_bias(ks[5], output_dim, hidden_dim2),
        # BatchNorm params / running stats (random but deterministic to exercise the math)
        "bn1_g": 1.0 + 0.1 * jax.random.normal(ks[6], (hidden_dim1,), jnp.float32),
        "bn1_b": 0.1 * jax.random.normal(ks[7], (hidden_dim1,), jnp.float32),
        "bn1_m": 0.1 * jax.random.normal(ks[8], (hidden_dim1,), jnp.float32),
        "bn1_v": 1.0 + 0.1 * jnp.abs(jax.random.normal(ks[9], (hidden_dim1,), jnp.float32)),
        "bn2_g": 1.0 + 0.1 * jax.random.normal(ks[10], (hidden_dim2,), jnp.float32),
        "bn2_b": 0.1 * jax.random.normal(ks[11], (hidden_dim2,), jnp.float32),
        "bn2_m": jnp.zeros((hidden_dim2,), jnp.float32),
        "bn2_v": jnp.ones((hidden_dim2,), jnp.float32),
    }


def reference_forward(x, params):
    """Pure-JAX f32 mirror of the PyTorch forward (inference mode)."""
    h1 = x @ params["fc1_w"].T + params["fc1_b"]
    h1 = (h1 - params["bn1_m"]) / jnp.sqrt(params["bn1_v"] + EPS) * params["bn1_g"] + params["bn1_b"]
    spk1 = (h1 > THRESHOLD).astype(jnp.float32)
    h2 = spk1 @ params["fc2_w"].T + params["fc2_b"]
    h2 = (h2 - params["bn2_m"]) / jnp.sqrt(params["bn2_v"] + EPS) * params["bn2_g"] + params["bn2_b"]
    spk2 = (h2 > THRESHOLD).astype(jnp.float32)
    return spk2 @ params["fc3_w"].T + params["fc3_b"]


def reference_forward_prepared(x, prepared):
    """Pure-JAX mirror of the kernel's exact math / precision policy (folded + cast)."""
    h1 = jnp.dot(x, prepared["w1"], preferred_element_type=jnp.float32) + prepared["t1"]
    spk1 = (h1 > THRESHOLD).astype(prepared["w2"].dtype)
    h2 = jnp.dot(spk1, prepared["w2"], preferred_element_type=jnp.float32) + prepared["t2"]
    spk2 = (h2 > THRESHOLD).astype(prepared["w3"].dtype)
    return jnp.dot(spk2, prepared["w3"], preferred_element_type=jnp.float32) + prepared["b3"]


# -----------------------------------------------------------------------------
# Demo / self-check
# -----------------------------------------------------------------------------
if __name__ == "__main__":
    # Small shapes consistent with the module: traffic feature vectors [B, input_dim].
    B, INPUT_DIM, HID1, HID2, OUT_DIM = 256, 16, 128, 64, 2

    key = jax.random.PRNGKey(0)
    kx, kp = jax.random.split(key)
    x = jax.random.normal(kx, (B, INPUT_DIM), jnp.float32)
    params = init_params(kp, INPUT_DIM, HID1, HID2, OUT_DIM)

    # (a) Exact-fidelity path: f32 weights everywhere -> must match the unfolded
    #     PyTorch-style f32 reference.  Tolerance is modest because BN-folding changes
    #     rounding; inputs whose pre-activation sits within a few ulps of the spike
    #     threshold could flip a spike (inherent to the fusion, not a bug).
    prep_f32 = prepare_params(params, mxu_dtype=jnp.float32)
    out_f32 = jax.block_until_ready(modified_traffic_snn(x, prep_f32))
    ref_f32 = reference_forward(x, params)
    assert out_f32.shape == (B, OUT_DIM)
    assert jnp.allclose(out_f32, ref_f32, atol=1e-4, rtol=1e-4), "f32 path mismatch vs reference"

    # (b) Production precision policy: bf16 MXU inputs for the spike-side layers,
    #     validated against a plain-JAX mirror of the same precision path.
    prep_bf16 = prepare_params(params)  # mxu_dtype defaults to bfloat16
    out_bf16 = jax.block_until_ready(modified_traffic_snn(x, prep_bf16))
    ref_bf16 = reference_forward_prepared(x, prep_bf16)
    assert out_bf16.shape == (B, OUT_DIM)
    assert jnp.allclose(out_bf16, ref_bf16, atol=1e-4, rtol=1e-4), "bf16 path mismatch vs mirror"

    # (c) Odd batch size exercises the zero-row padding path (no full-batch fallback).
    x_odd = x[: B - 3]
    out_odd = jax.block_until_ready(modified_traffic_snn(x_odd, prep_bf16))
    assert out_odd.shape == (B - 3, OUT_DIM)
    assert jnp.allclose(out_odd, ref_bf16[: B - 3], atol=1e-4, rtol=1e-4), "padded-batch path mismatch"

    # TODO(synk): training-mode BatchNorm (batch stats) and Dropout masking are not
    # implemented; this kernel reproduces inference semantics only.
    print("KERNEL_OK")
</pallas_src>

<mosaic_0001>
module attributes {stable_mosaic.version = 11 : i64} {
  func.func @snn_kernel(%arg0: i32, %arg1: memref<64x16xf32, #tpu.memory_space<vmem>>, %arg2: memref<16x128xf32, #tpu.memory_space<vmem>>, %arg3: memref<1x128xf32, #tpu.memory_space<vmem>>, %arg4: memref<128x64xf32, #tpu.memory_space<vmem>>, %arg5: memref<1x64xf32, #tpu.memory_space<vmem>>, %arg6: memref<64x2xf32, #tpu.memory_space<vmem>>, %arg7: memref<1x2xf32, #tpu.memory_space<vmem>>, %arg8: memref<64x2xf32, #tpu.memory_space<vmem>>) attributes {dimension_semantics = [#tpu.dimension_semantics<parallel>], iteration_bounds = array<i64: 4>, scalar_prefetch = 0 : i64, scratch_operands = 0 : i64, tpu.core_type = #tpu.core_type<tc>, window_params = [{transform_indices = @transform_0, window_bounds = array<i64: 64, 16>}, {pipeline_mode = #tpu.pipeline_mode<synchronous>, transform_indices = @transform_1, window_bounds = array<i64: 16, 128>}, {pipeline_mode = #tpu.pipeline_mode<synchronous>, transform_indices = @transform_2, window_bounds = array<i64: 1, 128>}, {pipeline_mode = #tpu.pipeline_mode<synchronous>, transform_indices = @transform_3, window_bounds = array<i64: 128, 64>}, {pipeline_mode = #tpu.pipeline_mode<synchronous>, transform_indices = @transform_4, window_bounds = array<i64: 1, 64>}, {pipeline_mode = #tpu.pipeline_mode<synchronous>, transform_indices = @transform_5, window_bounds = array<i64: 64, 2>}, {pipeline_mode = #tpu.pipeline_mode<synchronous>, transform_indices = @transform_6, window_bounds = array<i64: 1, 2>}, {transform_indices = @transform_7, window_bounds = array<i64: 64, 2>}]} {
    %c0 = arith.constant 0 : index
    %c0_0 = arith.constant 0 : index
    %0 = vector.load %arg1[%c0, %c0_0] : memref<64x16xf32, #tpu.memory_space<vmem>>, vector<64x16xf32>
    %c0_1 = arith.constant 0 : index
    %c0_2 = arith.constant 0 : index
    %1 = vector.load %arg2[%c0_1, %c0_2] : memref<16x128xf32, #tpu.memory_space<vmem>>, vector<16x128xf32>
    %cst = arith.constant dense<0.000000e+00> : vector<64x128xf32>
    %2 = tpu.matmul %0, %1, %cst {dimension_numbers = #tpu.dot_dimension_numbers<[1], [0], [0], [1], [0, 0, 1, 1], [], []>} : vector<64x16xf32>, vector<16x128xf32>, vector<64x128xf32> -> vector<64x128xf32>
    %c0_3 = arith.constant 0 : index
    %c0_4 = arith.constant 0 : index
    %3 = vector.load %arg3[%c0_3, %c0_4] : memref<1x128xf32, #tpu.memory_space<vmem>>, vector<1x128xf32>
    %4 = vector.broadcast %3 : vector<1x128xf32> to vector<64x128xf32>
    %5 = arith.addf %2, %4 : vector<64x128xf32>
    %cst_5 = arith.constant 1.000000e+00 : f32
    %6 = vector.broadcast %cst_5 : f32 to vector<64x128xf32>
    %7 = arith.cmpf ogt, %5, %6 : vector<64x128xf32>
    %8 = arith.extui %7 : vector<64x128xi1> to vector<64x128xi32>
    %9 = arith.sitofp %8 : vector<64x128xi32> to vector<64x128xf32>
    %c0_6 = arith.constant 0 : index
    %c0_7 = arith.constant 0 : index
    %10 = vector.load %arg4[%c0_6, %c0_7] : memref<128x64xf32, #tpu.memory_space<vmem>>, vector<128x64xf32>
    %cst_8 = arith.constant dense<0.000000e+00> : vector<64x64xf32>
    %11 = tpu.matmul %9, %10, %cst_8 {dimension_numbers = #tpu.dot_dimension_numbers<[1], [0], [0], [1], [0, 0, 1, 1], [], []>} : vector<64x128xf32>, vector<128x64xf32>, vector<64x64xf32> -> vector<64x64xf32>
    %c0_9 = arith.constant 0 : index
    %c0_10 = arith.constant 0 : index
    %12 = vector.load %arg5[%c0_9, %c0_10] : memref<1x64xf32, #tpu.memory_space<vmem>>, vector<1x64xf32>
    %13 = vector.broadcast %12 : vector<1x64xf32> to vector<64x64xf32>
    %14 = arith.addf %11, %13 : vector<64x64xf32>
    %cst_11 = arith.constant 1.000000e+00 : f32
    %15 = vector.broadcast %cst_11 : f32 to vector<64x64xf32>
    %16 = arith.cmpf ogt, %14, %15 : vector<64x64xf32>
    %17 = arith.extui %16 : vector<64x64xi1> to vector<64x64xi32>
    %18 = arith.sitofp %17 : vector<64x64xi32> to vector<64x64xf32>
    %c0_12 = arith.constant 0 : index
    %c0_13 = arith.constant 0 : index
    %19 = vector.load %arg6[%c0_12, %c0_13] : memref<64x2xf32, #tpu.memory_space<vmem>>, vector<64x2xf32>
    %cst_14 = arith.constant dense<0.000000e+00> : vector<64x2xf32>
    %20 = tpu.matmul %18, %19, %cst_14 {dimension_numbers = #tpu.dot_dimension_numbers<[1], [0], [0], [1], [0, 0, 1, 1], [], []>} : vector<64x64xf32>, vector<64x2xf32>, vector<64x2xf32> -> vector<64x2xf32>
    %c0_15 = arith.constant 0 : index
    %c0_16 = arith.constant 0 : index
    %21 = vector.load %arg7[%c0_15, %c0_16] : memref<1x2xf32, #tpu.memory_space<vmem>>, vector<1x2xf32>
    %22 = vector.broadcast %21 : vector<1x2xf32> to vector<64x2xf32>
    %23 = arith.addf %20, %22 : vector<64x2xf32>
    %c0_17 = arith.constant 0 : index
    %c0_18 = arith.constant 0 : index
    %24 = vector.load %arg8[%c0_17, %c0_18] : memref<64x2xf32, #tpu.memory_space<vmem>>, vector<64x2xf32>
    tpu.vector_store %arg8[%c0_17, %c0_18], %23 {strides = array<i32>} : memref<64x2xf32, #tpu.memory_space<vmem>>, vector<64x2xf32>,
    return
  }
  func.func @transform_0(%arg0: i32) -> (i32, i32) {
    %c0_i32 = arith.constant 0 : i32
    %c0_i32_0 = arith.constant 0 : i32
    return %arg0, %c0_i32 : i32, i32
  }
  func.func @transform_1(%arg0: i32) -> (i32, i32) {
    %c0_i32 = arith.constant 0 : i32
    %c0_i32_0 = arith.constant 0 : i32
    %c0_i32_1 = arith.constant 0 : i32
    return %c0_i32, %c0_i32_0 : i32, i32
  }
  func.func @transform_2(%arg0: i32) -> (i32, i32) {
    %c0_i32 = arith.constant 0 : i32
    %c0_i32_0 = arith.constant 0 : i32
    %c0_i32_1 = arith.constant 0 : i32
    return %c0_i32, %c0_i32_0 : i32, i32
  }
  func.func @transform_3(%arg0: i32) -> (i32, i32) {
    %c0_i32 = arith.constant 0 : i32
    %c0_i32_0 = arith.constant 0 : i32
    %c0_i32_1 = arith.constant 0 : i32
    return %c0_i32, %c0_i32_0 : i32, i32
  }
  func.func @transform_4(%arg0: i32) -> (i32, i32) {
    %c0_i32 = arith.constant 0 : i32
    %c0_i32_0 = arith.constant 0 : i32
    %c0_i32_1 = arith.constant 0 : i32
    return %c0_i32, %c0_i32_0 : i32, i32
  }
  func.func @transform_5(%arg0: i32) -> (i32, i32) {
    %c0_i32 = arith.constant 0 : i32
    %c0_i32_0 = arith.constant 0 : i32
    %c0_i32_1 = arith.constant 0 : i32
    return %c0_i32, %c0_i32_0 : i32, i32
  }
  func.func @transform_6(%arg0: i32) -> (i32, i32) {
    %c0_i32 = arith.constant 0 : i32
    %c0_i32_0 = arith.constant 0 : i32
    %c0_i32_1 = arith.constant 0 : i32
    return %c0_i32, %c0_i32_0 : i32, i32
  }
  func.func @transform_7(%arg0: i32) -> (i32, i32) {
    %c0_i32 = arith.constant 0 : i32
    %c0_i32_0 = arith.constant 0 : i32
    return %arg0, %c0_i32 : i32, i32
  }
}

</mosaic_0001>

<llo_original>
// kernel: tpu_custom_call.1
$region0: #{tpu_custom_call.1}
  #allocation0 [shape = 'u32[]', space=smem, size = 0x4, offset = 0x4, fixed_abs, tag = 'smem constant byte address 0x4 - core index']
  #allocation1 [shape = 'u32[144,128]{1,0:T(1,128)}', space=vmem, size = 0x12000, scoped, tag = 'internal scratch']
  %s0 = inlined_call_operand.vmem [shape: f32[256,16], index: 0, kind: input, shape index: {}]
  %s1 = inlined_call_operand.vmem [shape: f32[16,128], index: 1, kind: input, shape index: {}]
  %s2 = inlined_call_operand.vmem [shape: f32[1,128], index: 2, kind: input, shape index: {}]
  %s3 = inlined_call_operand.vmem [shape: f32[128,64], index: 3, kind: input, shape index: {}]
  %s4 = inlined_call_operand.vmem [shape: f32[1,64], index: 4, kind: input, shape index: {}]
  %s5 = inlined_call_operand.vmem [shape: f32[64,2], index: 5, kind: input, shape index: {}]
  %s6 = inlined_call_operand.vmem [shape: f32[1,2], index: 6, kind: input, shape index: {}]
  %s7 = inlined_call_operand.vmem [shape: f32[256,2], index: 7, kind: output, shape index: {}]
  %s8 = sld [smem:[#allocation0]]
  $region61: #{tpu_custom_call.1} parent=0
    _
  %s10 = ssub.s32 1, %s8
  %s11 = scalar_select 0, %s10, %s8
  loop: start=0, step=1, limit=6
  $region2: #{tpu_custom_call.1} parent=0 // loop_pre_header
    _
  $region3: #{tpu_custom_call.1} parent=0 // loop_header
    %s13 = sphi 0, %s17
    %p14 = scmp.ge.s32.totalorder %s13, 6
    %s23 = sphi 0, %s25
    %s26 = sphi 0, %s23
    %s27 = sphi 0, %s26
    %s43 = sphi 0, %s27
    %s47 = sphi 0, %s47
    %s49 = sphi 0, %s47
    %s50 = sphi 0, %s49
    %s64 = sphi 0, %s50
    %s68 = sphi 0, %s68
    %s70 = sphi 0, %s68
    %s71 = sphi 0, %s70
    %s85 = sphi 0, %s71
    %s89 = sphi 0, %s89
    %s91 = sphi 0, %s89
    %s92 = sphi 0, %s91
    %s106 = sphi 0, %s92
    %s110 = sphi 0, %s110
    %s112 = sphi 0, %s110
    %s113 = sphi 0, %s112
    %s127 = sphi 0, %s113
    %s131 = sphi 0, %s131
    %s133 = sphi 0, %s131
    %s134 = sphi 0, %s133
    %s148 = sphi 0, %s134
    %s152 = sphi 0, %s152
    %s154 = sphi 0, %s152
    %s155 = sphi 0, %s154
    %s169 = sphi 0, %s155
    %s175 = sphi 0, %s177
    %s178 = sphi 0, %s175
    %s179 = sphi 0, %s178
    %s195 = sphi 0, %s179
  $region4: #{tpu_custom_call.1} parent=0 // loop_header_branch
    %16 = sbr.rel (%p14) target = $region8
  $region5: #{tpu_custom_call.1} parent=0 // loop_body
    %s18 = ssub.s32 %s13, 1
    %s19 = ssub.s32 %s13, 2
    %s20 = sadd.s32 %s13, 1
    %s21 = ssub.s32 %s13, %s20
    %p22 = scmp.eq.s32.totalorder %s21, 0
    %s24 = sadd.s32 %s23, 1
    %s25 = scalar_select %p22, %s23, %s24
    %p28 = pneg %p22
    %p29 = scmp.eq.s32.totalorder %s13, 3
    %p30 = por %p28, %p29
    %p31 = scmp.ne.s32.totalorder %s23, %s26
    %p32 = scmp.eq.s32.totalorder %s13, 0
    %p33 = por %p31, %p32
    %p34 = scmp.ne.s32.totalorder %s23, %s26
    %p35 = scmp.eq.s32.totalorder %s18, 3
    %p36 = por %p34, %p35
    %p37 = scmp.ne.s32.totalorder %s26, %s27
    %p38 = scmp.eq.s32.totalorder %s18, 0
    %p39 = por %p37, %p38
    %p40 = scmp.ne.s32.totalorder %s26, %s27
    %p41 = scmp.eq.s32.totalorder %s19, 3
    %p42 = por %p40, %p41
    %p44 = scmp.ne.s32.totalorder %s27, %s43
    %p45 = scmp.eq.s32.totalorder %s19, 0
    %p46 = por %p44, %p45
    %s48 = sadd.s32 %s47, 1
    %p51 = scmp.eq.s32.totalorder %s13, 3
    %p52 = scmp.ne.s32.totalorder %s47, %s49
    %p53 = scmp.eq.s32.totalorder %s13, 0
    %p54 = por %p52, %p53
    %p55 = scmp.ne.s32.totalorder %s47, %s49
    %p56 = scmp.eq.s32.totalorder %s18, 3
    %p57 = por %p55, %p56
    %p58 = scmp.ne.s32.totalorder %s49, %s50
    %p59 = scmp.eq.s32.totalorder %s18, 0
    %p60 = por %p58, %p59
    %p61 = scmp.ne.s32.totalorder %s49, %s50
    %p62 = scmp.eq.s32.totalorder %s19, 3
    %p63 = por %p61, %p62
    %p65 = scmp.ne.s32.totalorder %s50, %s64
    %p66 = scmp.eq.s32.totalorder %s19, 0
    %p67 = por %p65, %p66
    %s69 = sadd.s32 %s68, 1
    %p72 = scmp.eq.s32.totalorder %s13, 3
    %p73 = scmp.ne.s32.totalorder %s68, %s70
    %p74 = scmp.eq.s32.totalorder %s13, 0
    %p75 = por %p73, %p74
    %p76 = scmp.ne.s32.totalorder %s68, %s70
    %p77 = scmp.eq.s32.totalorder %s18, 3
    %p78 = por %p76, %p77
    %p79 = scmp.ne.s32.totalorder %s70, %s71
    %p80 = scmp.eq.s32.totalorder %s18, 0
    %p81 = por %p79, %p80
    %p82 = scmp.ne.s32.totalorder %s70, %s71
    %p83 = scmp.eq.s32.totalorder %s19, 3
    %p84 = por %p82, %p83
    %p86 = scmp.ne.s32.totalorder %s71, %s85
    %p87 = scmp.eq.s32.totalorder %s19, 0
    %p88 = por %p86, %p87
    %s90 = sadd.s32 %s89, 1
    %p93 = scmp.eq.s32.totalorder %s13, 3
    %p94 = scmp.ne.s32.totalorder %s89, %s91
    %p95 = scmp.eq.s32.totalorder %s13, 0
    %p96 = por %p94, %p95
    %p97 = scmp.ne.s32.totalorder %s89, %s91
    %p98 = scmp.eq.s32.totalorder %s18, 3
    %p99 = por %p97, %p98
    %p100 = scmp.ne.s32.totalorder %s91, %s92
    %p101 = scmp.eq.s32.totalorder %s18, 0
    %p102 = por %p100, %p101
    %p103 = scmp.ne.s32.totalorder %s91, %s92
    %p104 = scmp.eq.s32.totalorder %s19, 3
    %p105 = por %p103, %p104
    %p107 = scmp.ne.s32.totalorder %s92, %s106
    %p108 = scmp.eq.s32.totalorder %s19, 0
    %p109 = por %p107, %p108
    %s111 = sadd.s32 %s110, 1
    %p114 = scmp.eq.s32.totalorder %s13, 3
    %p115 = scmp.ne.s32.totalorder %s110, %s112
    %p116 = scmp.eq.s32.totalorder %s13, 0
    %p117 = por %p115, %p116
    %p118 = scmp.ne.s32.totalorder %s110, %s112
    %p119 = scmp.eq.s32.totalorder %s18, 3
    %p120 = por %p118, %p119
    %p121 = scmp.ne.s32.totalorder %s112, %s113
    %p122 = scmp.eq.s32.totalorder %s18, 0
    %p123 = por %p121, %p122
    %p124 = scmp.ne.s32.totalorder %s112, %s113
    %p125 = scmp.eq.s32.totalorder %s19, 3
    %p126 = por %p124, %p125
    %p128 = scmp.ne.s32.totalorder %s113, %s127
    %p129 = scmp.eq.s32.totalorder %s19, 0
    %p130 = por %p128, %p129
    %s132 = sadd.s32 %s131, 1
    %p135 = scmp.eq.s32.totalorder %s13, 3
    %p136 = scmp.ne.s32.totalorder %s131, %s133
    %p137 = scmp.eq.s32.totalorder %s13, 0
    %p138 = por %p136, %p137
    %p139 = scmp.ne.s32.totalorder %s131, %s133
    %p140 = scmp.eq.s32.totalorder %s18, 3
    %p141 = por %p139, %p140
    %p142 = scmp.ne.s32.totalorder %s133, %s134
    %p143 = scmp.eq.s32.totalorder %s18, 0
    %p144 = por %p142, %p143
    %p145 = scmp.ne.s32.totalorder %s133, %s134
    %p146 = scmp.eq.s32.totalorder %s19, 3
    %p147 = por %p145, %p146
    %p149 = scmp.ne.s32.totalorder %s134, %s148
    %p150 = scmp.eq.s32.totalorder %s19, 0
    %p151 = por %p149, %p150
    %s153 = sadd.s32 %s152, 1
    %p156 = scmp.eq.s32.totalorder %s13, 3
    %p157 = scmp.ne.s32.totalorder %s152, %s154
    %p158 = scmp.eq.s32.totalorder %s13, 0
    %p159 = por %p157, %p158
    %p160 = scmp.ne.s32.totalorder %s152, %s154
    %p161 = scmp.eq.s32.totalorder %s18, 3
    %p162 = por %p160, %p161
    %p163 = scmp.ne.s32.totalorder %s154, %s155
    %p164 = scmp.eq.s32.totalorder %s18, 0
    %p165 = por %p163, %p164
    %p166 = scmp.ne.s32.totalorder %s154, %s155
    %p167 = scmp.eq.s32.totalorder %s19, 3
    %p168 = por %p166, %p167
    %p170 = scmp.ne.s32.totalorder %s155, %s169
    %p171 = scmp.eq.s32.totalorder %s19, 0
    %p172 = por %p170, %p171
    %s173 = ssub.s32 %s13, %s20
    %p174 = scmp.eq.s32.totalorder %s173, 0
    %s176 = sadd.s32 %s175, 1
    %s177 = scalar_select %p174, %s175, %s176
    %p180 = pneg %p174
    %p181 = scmp.eq.s32.totalorder %s13, 3
    %p182 = por %p180, %p181
    %p183 = scmp.ne.s32.totalorder %s175, %s178
    %p184 = scmp.eq.s32.totalorder %s13, 0
    %p185 = por %p183, %p184
    %p186 = scmp.ne.s32.totalorder %s175, %s178
    %p187 = scmp.eq.s32.totalorder %s18, 3
    %p188 = por %p186, %p187
    %p189 = scmp.ne.s32.totalorder %s178, %s179
    %p190 = scmp.eq.s32.totalorder %s18, 0
    %p191 = por %p189, %p190
    %p192 = scmp.ne.s32.totalorder %s178, %s179
    %p193 = scmp.eq.s32.totalorder %s19, 3
    %p194 = por %p192, %p193
    %p196 = scmp.ne.s32.totalorder %s179, %s195
    %p197 = scmp.eq.s32.totalorder %s19, 0
    %p198 = por %p196, %p197
    %p199 = scmp.le.s32.totalorder 1, %s13
    %p200 = scmp.lt.s32.totalorder %s13, 5
    %p201 = pnand %p199, %p200
    %p202 = pneg %p201
    // Predicated region
    $region9: #{tpu_custom_call.1} parent=5 // pred_check
      _
    $region10: #{tpu_custom_call.1} parent=5 // pred_check_branch
      %204 = sbr.rel (%p201) target = $region12
    $region11: #{tpu_custom_call.1} parent=5 // pred_region
      %s205 = ssub.s32 %s13, 1
      // Predicated region
      $region13: #{tpu_custom_call.1} parent=11 // pred_check
        %p206 = pneg %p60
      $region14: #{tpu_custom_call.1} parent=11 // pred_check_branch
        %208 = sbr.rel (%p206) target = $region16
      $region15: #{tpu_custom_call.1} parent=11 // pred_region
        _
      $region16: #{tpu_custom_call.1} parent=11 // pred_fallthru
        _
      // Predicated region
      $region17: #{tpu_custom_call.1} parent=11 // pred_check
        %p209 = pneg %p81
      $region18: #{tpu_custom_call.1} parent=11 // pred_check_branch
        %211 = sbr.rel (%p209) target = $region20
      $region19: #{tpu_custom_call.1} parent=11 // pred_region
        _
      $region20: #{tpu_custom_call.1} parent=11 // pred_fallthru
        _
      // Predicated region
      $region21: #{tpu_custom_call.1} parent=11 // pred_check
        %p212 = pneg %p102
      $region22: #{tpu_custom_call.1} parent=11 // pred_check_branch
        %214 = sbr.rel (%p212) target = $region24
      $region23: #{tpu_custom_call.1} parent=11 // pred_region
        _
      $region24: #{tpu_custom_call.1} parent=11 // pred_fallthru
        _
      // Predicated region
      $region25: #{tpu_custom_call.1} parent=11 // pred_check
        %p215 = pneg %p123
      $region26: #{tpu_custom_call.1} parent=11 // pred_check_branch
        %217 = sbr.rel (%p215) target = $region28
      $region27: #{tpu_custom_call.1} parent=11 // pred_region
        _
      $region28: #{tpu_custom_call.1} parent=11 // pred_fallthru
        _
      // Predicated region
      $region29: #{tpu_custom_call.1} parent=11 // pred_check
        %p218 = pneg %p144
      $region30: #{tpu_custom_call.1} parent=11 // pred_check_branch
        %220 = sbr.rel (%p218) target = $region32
      $region31: #{tpu_custom_call.1} parent=11 // pred_region
        _
      $region32: #{tpu_custom_call.1} parent=11 // pred_fallthru
        _
      // Predicated region
      $region33: #{tpu_custom_call.1} parent=11 // pred_check
        %p221 = pneg %p165
      $region34: #{tpu_custom_call.1} parent=11 // pred_check_branch
        %223 = sbr.rel (%p221) target = $region36
      $region35: #{tpu_custom_call.1} parent=11 // pred_region
        _
      $region36: #{tpu_custom_call.1} parent=11 // pred_fallthru
        _
    $region12: #{tpu_custom_call.1} parent=5 // pred_fallthru
      _
    %p224 = scmp.lt.s32.totalorder %s13, 4
    // Predicated region
    $region37: #{tpu_custom_call.1} parent=5 // pred_check
      %p225 = pneg %p224
    $region38: #{tpu_custom_call.1} parent=5 // pred_check_branch
      %227 = sbr.rel (%p225) target = $region40
    $region39: #{tpu_custom_call.1} parent=5 // pred_region
      // Predicated region
      $region41: #{tpu_custom_call.1} parent=39 // pred_check
        %p228 = pneg %p33
      $region42: #{tpu_custom_call.1} parent=39 // pred_check_branch
        %230 = sbr.rel (%p228) target = $region44
      $region43: #{tpu_custom_call.1} parent=39 // pred_region
        %s231 = smul.u32 8, %s13
        %p232 = scmp.lt.s32.totalorder %s231, 31
        %s233 = scalar_select %p232, %s231, 31
        %s234 = smul.addr %s233, 8
        %s235 = scalar_lea.vmem %s0, %s234
        %s236 = smul.u32 8, %s13
      $region44: #{tpu_custom_call.1} parent=39 // pred_fallthru
        _
    $region40: #{tpu_custom_call.1} parent=5 // pred_fallthru
      _
    %p237 = scmp.le.s32.totalorder 1, %s13
    %p238 = scmp.lt.s32.totalorder %s13, 5
    %p239 = pnand %p237, %p238
    %p240 = pneg %p239
    // Predicated region
    $region45: #{tpu_custom_call.1} parent=5 // pred_check
      _
    $region46: #{tpu_custom_call.1} parent=5 // pred_check_branch
      %242 = sbr.rel (%p239) target = $region48
    $region47: #{tpu_custom_call.1} parent=5 // pred_region
      %s243 = ssub.s32 %s13, 1
      %s244 = smul.u32 8, %s18
      %p245 = scmp.lt.s32.totalorder %s244, 31
      %s246 = scalar_select %p245, %s244, 31
      %s247 = smul.addr %s246, 8
      %s248 = scalar_lea.vmem %s0, %s247
      %p249 = pneg %p39
      %p250 = pneg %p36
      %p251 = pneg %p60
      %p252 = pneg %p57
      %p253 = pneg %p81
      %p254 = pneg %p78
      %p255 = pneg %p102
      %p256 = pneg %p99
      %p257 = pneg %p123
      %p258 = pneg %p120
      %p259 = pneg %p144
      %p260 = pneg %p141
      %p261 = pneg %p165
      %p262 = pneg %p162
      %p263 = pneg %p191
      %p264 = pneg %p188
      %s265 = smul.u32 8, %s18
      %p266 = scmp.lt.s32.totalorder %s265, 31
      %s267 = scalar_select %p266, %s265, 31
      %s268 = smul.addr %s267, 8
      %s269 = scalar_lea.vmem %s7, %s268
      %s270 = smul.u32 8, %s18
      %p271 = scmp.lt.s32.totalorder %s270, 31
      %s272 = scalar_select %p271, %s270, 31
      %s273 = smul.addr %s272, 8
      %s274 = scalar_lea.vmem %s0, %s273
      %s275 = smul.u32 8, %s18
      %s276 = smul.u32 8, %s18
      %p277 = scmp.lt.s32.totalorder %s276, 31
      %s278 = scalar_select %p277, %s276, 31
      %s279 = smul.addr %s278, 8
      %s280 = scalar_lea.vmem %s7, %s279
      %s281 = smul.u32 8, %s18
      %v282 = vld [vmem:[%s274] sm:$0xff]
      %v283 = vld [vmem:[%s274 + $0x8] sm:$0xff]
      %v284 = vld [vmem:[%s274 + $0x10] sm:$0xff]
      %v285 = vld [vmem:[%s274 + $0x18] sm:$0xff]
      %v286 = vld [vmem:[%s274 + $0x20] sm:$0xff]
      %v287 = vld [vmem:[%s274 + $0x28] sm:$0xff]
      %v288 = vld [vmem:[%s274 + $0x30] sm:$0xff]
      %v289 = vld [vmem:[%s274 + $0x38] sm:$0xff]
      %v290 = vld [vmem:[%s1] sm:$0xff]
      %v291 = vld [vmem:[%s1 + $0x8] sm:$0xff]
      %v292 = vld [vmem:[%s2] sm:$0x1]
      %v294 = vlaneseq
      %v295 = vshrl.u32 %v294, 7
      %v296 = vsub.s32 0, %v295
      %v297 = vrot.slane %v292, %v296
      %vm299 = vcmask 130048
      %v301 = vsel %vm299, %v282, 0
      %v304 = vsel %vm299, %v283, 0
      %v307 = vsel %vm299, %v284, 0
      %v310 = vsel %vm299, %v285, 0
      %v313 = vsel %vm299, %v286, 0
      %v316 = vsel %vm299, %v287, 0
      %v319 = vsel %vm299, %v288, 0
      %v322 = vsel %vm299, %v289, 0
      %324 = vmatprep.subr.mxu0 0.0
      %325 = vmatpush1.msra.mxu0 0.0
      %326 = vmatprep.subr.mxu0 0.0
      %327 = vmatpush1.msra.mxu0 0.0
      %328 = vmatprep.subr.mxu0 0.0
      %329 = vmatpush1.msra.mxu0 0.0
      %330 = vmatprep.subr.mxu0 0.0
      %331 = vmatpush1.msra.mxu0 0.0
      %332 = vmatprep.subr.mxu0 0.0
      %333 = vmatpush1.msra.mxu0 0.0
      %334 = vmatprep.subr.mxu0 0.0
      %335 = vmatpush1.msra.mxu0 0.0
      %336 = vmatprep.subr.mxu0 0.0
      %337 = vmatpush1.msra.mxu0 0.0
      %338 = vmatprep.subr.mxu0 0.0
      %339 = vmatpush1.msra.mxu0 0.0
      %340 = vmatprep.subr.mxu0 0.0
      %341 = vmatpush1.msra.mxu0 0.0
      %342 = vmatprep.subr.mxu0 0.0
      %343 = vmatpush1.msra.mxu0 0.0
      %344 = vmatprep.subr.mxu0 0.0
      %345 = vmatpush1.msra.mxu0 0.0
      %346 = vmatprep.subr.mxu0 0.0
      %347 = vmatpush1.msra.mxu0 0.0
      %348 = vmatprep.subr.mxu0 0.0
      %349 = vmatpush1.msra.mxu0 0.0
      %350 = vmatprep.subr.mxu0 0.0
      %351 = vmatpush1.msra.mxu0 0.0
      %352 = vmatprep.subr.mxu0 0.0
      %353 = vmatpush1.msra.mxu0 %v291
      %354 = vmatprep.subr.mxu0 0.0
      %355 = vmatpush1.msra.mxu0 %v290
      %356 = vmatprep.subr.mxu0 0.0
      %357 = vmatpush2.msra.mxu0 0.0
      %358 = vmatprep.subr.mxu0 0.0
      %359 = vmatpush2.msra.mxu0 0.0
      %360 = vmatprep.subr.mxu0 0.0
      %361 = vmatpush2.msra.mxu0 0.0
      %362 = vmatprep.subr.mxu0 0.0
      %363 = vmatpush2.msra.mxu0 0.0
      %364 = vmatprep.subr.mxu0 0.0
      %365 = vmatpush2.msra.mxu0 0.0
      %366 = vmatprep.subr.mxu0 0.0
      %367 = vmatpush2.msra.mxu0 0.0
      %368 = vmatprep.subr.mxu0 0.0
      %369 = vmatpush2.msra.mxu0 0.0
      %370 = vmatprep.subr.mxu0 0.0
      %371 = vmatpush2.msra.mxu0 0.0
      %372 = vmatprep.subr.mxu0 0.0
      %373 = vmatpush2.msra.mxu0 0.0
      %374 = vmatprep.subr.mxu0 0.0
      %375 = vmatpush2.msra.mxu0 0.0
      %376 = vmatprep.subr.mxu0 0.0
      %377 = vmatpush2.msra.mxu0 0.0
      %378 = vmatprep.subr.mxu0 0.0
      %379 = vmatpush2.msra.mxu0 0.0
      %380 = vmatprep.subr.mxu0 0.0
      %381 = vmatpush2.msra.mxu0 0.0
      %382 = vmatprep.subr.mxu0 0.0
      %383 = vmatpush2.msra.mxu0 0.0
      %384 = vmatprep.subr.mxu0 0.0
      %385 = vmatpush2.msra.mxu0 0.0
      %386 = vmatprep.subr.mxu0 0.0
      %387 = vmatpush2.msra.mxu0 0.0
      %388 = vmatprep.mubr.f32.mxu0 0.0
      %389 = vmatmul.mubr.f32.gmra.mxu0 %v301
      %v390 = vpop.f32.mrf.mxu0
      %v391 = vadd.f32 %v297, %v390
      %v392 = vpop.f32.mrf.mxu0
      %393 = vmatprep.mubr.f32.mxu0 0.0
      %394 = vmatmul.mubr.f32.gmra.mxu0 %v304
      %v395 = vpop.f32.mrf.mxu0
      %v396 = vadd.f32 %v297, %v395
      %v397 = vpop.f32.mrf.mxu0
      %398 = vmatprep.mubr.f32.mxu0 0.0
      %399 = vmatmul.mubr.f32.gmra.mxu0 %v307
      %v400 = vpop.f32.mrf.mxu0
      %v401 = vadd.f32 %v297, %v400
      %v402 = vpop.f32.mrf.mxu0
      %403 = vmatprep.mubr.f32.mxu0 0.0
      %404 = vmatmul.mubr.f32.gmra.mxu0 %v310
      %v405 = vpop.f32.mrf.mxu0
      %v406 = vadd.f32 %v297, %v405
      %v407 = vpop.f32.mrf.mxu0
      %408 = vmatprep.mubr.f32.mxu0 0.0
      %409 = vmatmul.mubr.f32.gmra.mxu0 %v313
      %v410 = vpop.f32.mrf.mxu0
      %v411 = vadd.f32 %v297, %v410
      %v412 = vpop.f32.mrf.mxu0
      %413 = vmatprep.mubr.f32.mxu0 0.0
      %414 = vmatmul.mubr.f32.gmra.mxu0 %v316
      %v415 = vpop.f32.mrf.mxu0
      %v416 = vadd.f32 %v297, %v415
      %v417 = vpop.f32.mrf.mxu0
      %418 = vmatprep.mubr.f32.mxu0 0.0
      %419 = vmatmul.mubr.f32.gmra.mxu0 %v319
      %v420 = vpop.f32.mrf.mxu0
      %v421 = vadd.f32 %v297, %v420
      %v422 = vpop.f32.mrf.mxu0
      %423 = vmatprep.mubr.f32.mxu0 0.0
      %424 = vmatmul.mubr.f32.gmra.mxu0 %v322
      %v425 = vpop.f32.mrf.mxu0
      %v426 = vadd.f32 %v297, %v425
      %v427 = vpop.f32.mrf.mxu0
      %428 = vdwg.mxu0
      %vm429 = vcmp.gt.f32.partialorder %v391, 1.0
      %vm430 = vcmp.gt.f32.partialorder %v396, 1.0
      %vm431 = vcmp.gt.f32.partialorder %v401, 1.0
      %vm432 = vcmp.gt.f32.partialorder %v406, 1.0
      %vm433 = vcmp.gt.f32.partialorder %v411, 1.0
      %vm434 = vcmp.gt.f32.partialorder %v416, 1.0
      %vm435 = vcmp.gt.f32.partialorder %v421, 1.0
      %vm436 = vcmp.gt.f32.partialorder %v426, 1.0
      %v437 = vsel %vm429, 1, 0
      %v438 = vsel %vm430, 1, 0
      %v439 = vsel %vm431, 1, 0
      %v440 = vsel %vm432, 1, 0
      %v441 = vsel %vm433, 1, 0
      %v442 = vsel %vm434, 1, 0
      %v443 = vsel %vm435, 1, 0
      %v444 = vsel %vm436, 1, 0
      %v445 = vcvt.s32.f32 %v437
      %v446 = vcvt.s32.f32 %v438
      %v447 = vcvt.s32.f32 %v439
      %v448 = vcvt.s32.f32 %v440
      %v449 = vcvt.s32.f32 %v441
      %v450 = vcvt.s32.f32 %v442
      %v451 = vcvt.s32.f32 %v443
      %v452 = vcvt.s32.f32 %v444
      %v453 = vld [vmem:[%s3] sm:$0xff]
      %v454 = vld [vmem:[%s3 + $0x8] sm:$0xff]
      %v455 = vld [vmem:[%s3 + $0x10] sm:$0xff]
      %v456 = vld [vmem:[%s3 + $0x18] sm:$0xff]
      %v457 = vld [vmem:[%s3 + $0x20] sm:$0xff]
      %v458 = vld [vmem:[%s3 + $0x28] sm:$0xff]
      %v459 = vld [vmem:[%s3 + $0x30] sm:$0xff]
      %v460 = vld [vmem:[%s3 + $0x38] sm:$0xff]
      %v461 = vld [vmem:[%s3 + $0x40] sm:$0xff]
      %v462 = vld [vmem:[%s3 + $0x48] sm:$0xff]
      %v463 = vld [vmem:[%s3 + $0x50] sm:$0xff]
      %v464 = vld [vmem:[%s3 + $0x58] sm:$0xff]
      %v465 = vld [vmem:[%s3 + $0x60] sm:$0xff]
      %v466 = vld [vmem:[%s3 + $0x68] sm:$0xff]
      %v467 = vld [vmem:[%s3 + $0x70] sm:$0xff]
      %v468 = vld [vmem:[%s3 + $0x78] sm:$0xff]
      %v469 = vld [vmem:[%s4] sm:$0x1]
      %v471 = vlaneseq
      %v472 = vshrl.u32 %v471, 7
      %v473 = vsub.s32 0, %v472
      %v474 = vrot.slane %v469, %v473
      %476 = vmatprep.subr.mxu0 0.0
      %477 = vmatpush1.msra.mxu0 %v468
      %478 = vmatprep.subr.mxu0 0.0
      %479 = vmatpush1.msra.mxu0 %v467
      %480 = vmatprep.subr.mxu0 0.0
      %481 = vmatpush1.msra.mxu0 %v466
      %482 = vmatprep.subr.mxu0 0.0
      %483 = vmatpush1.msra.mxu0 %v465
      %484 = vmatprep.subr.mxu0 0.0
      %485 = vmatpush1.msra.mxu0 %v464
      %486 = vmatprep.subr.mxu0 0.0
      %487 = vmatpush1.msra.mxu0 %v463
      %488 = vmatprep.subr.mxu0 0.0
      %489 = vmatpush1.msra.mxu0 %v462
      %490 = vmatprep.subr.mxu0 0.0
      %491 = vmatpush1.msra.mxu0 %v461
      %492 = vmatprep.subr.mxu0 0.0
      %493 = vmatpush1.msra.mxu0 %v460
      %494 = vmatprep.subr.mxu0 0.0
      %495 = vmatpush1.msra.mxu0 %v459
      %496 = vmatprep.subr.mxu0 0.0
      %497 = vmatpush1.msra.mxu0 %v458
      %498 = vmatprep.subr.mxu0 0.0
      %499 = vmatpush1.msra.mxu0 %v457
      %500 = vmatprep.subr.mxu0 0.0
      %501 = vmatpush1.msra.mxu0 %v456
      %502 = vmatprep.subr.mxu0 0.0
      %503 = vmatpush1.msra.mxu0 %v455
      %504 = vmatprep.subr.mxu0 0.0
      %505 = vmatpush1.msra.mxu0 %v454
      %506 = vmatprep.subr.mxu0 0.0
      %507 = vmatpush1.msra.mxu0 %v453
      %508 = vmatprep.subr.mxu0 0.0
      %509 = vmatpush2.msra.mxu0 0.0
      %510 = vmatprep.subr.mxu0 0.0
      %511 = vmatpush2.msra.mxu0 0.0
      %512 = vmatprep.subr.mxu0 0.0
      %513 = vmatpush2.msra.mxu0 0.0
      %514 = vmatprep.subr.mxu0 0.0
      %515 = vmatpush2.msra.mxu0 0.0
      %516 = vmatprep.subr.mxu0 0.0
      %517 = vmatpush2.msra.mxu0 0.0
      %518 = vmatprep.subr.mxu0 0.0
      %519 = vmatpush2.msra.mxu0 0.0
      %520 = vmatprep.subr.mxu0 0.0
      %521 = vmatpush2.msra.mxu0 0.0
      %522 = vmatprep.subr.mxu0 0.0
      %523 = vmatpush2.msra.mxu0 0.0
      %524 = vmatprep.subr.mxu0 0.0
      %525 = vmatpush2.msra.mxu0 0.0
      %526 = vmatprep.subr.mxu0 0.0
      %527 = vmatpush2.msra.mxu0 0.0
      %528 = vmatprep.subr.mxu0 0.0
      %529 = vmatpush2.msra.mxu0 0.0
      %530 = vmatprep.subr.mxu0 0.0
      %531 = vmatpush2.msra.mxu0 0.0
      %532 = vmatprep.subr.mxu0 0.0
      %533 = vmatpush2.msra.mxu0 0.0
      %534 = vmatprep.subr.mxu0 0.0
      %535 = vmatpush2.msra.mxu0 0.0
      %536 = vmatprep.subr.mxu0 0.0
      %537 = vmatpush2.msra.mxu0 0.0
      %538 = vmatprep.subr.mxu0 0.0
      %539 = vmatpush2.msra.mxu0 0.0
      %540 = vmatprep.mubr.f32.mxu0 0.0
      %541 = vmatmul.mubr.f32.gmra.mxu0 %v445
      %v542 = vpop.f32.mrf.mxu0
      %v543 = vadd.f32 %v474, %v542
      %v544 = vpop.f32.mrf.mxu0
      %545 = vmatprep.mubr.f32.mxu0 0.0
      %546 = vmatmul.mubr.f32.gmra.mxu0 %v446
      %v547 = vpop.f32.mrf.mxu0
      %v548 = vadd.f32 %v474, %v547
      %v549 = vpop.f32.mrf.mxu0
      %550 = vmatprep.mubr.f32.mxu0 0.0
      %551 = vmatmul.mubr.f32.gmra.mxu0 %v447
      %v552 = vpop.f32.mrf.mxu0
      %v553 = vadd.f32 %v474, %v552
      %v554 = vpop.f32.mrf.mxu0
      %555 = vmatprep.mubr.f32.mxu0 0.0
      %556 = vmatmul.mubr.f32.gmra.mxu0 %v448
      %v557 = vpop.f32.mrf.mxu0
      %v558 = vadd.f32 %v474, %v557
      %v559 = vpop.f32.mrf.mxu0
      %560 = vmatprep.mubr.f32.mxu0 0.0
      %561 = vmatmul.mubr.f32.gmra.mxu0 %v449
      %v562 = vpop.f32.mrf.mxu0
      %v563 = vadd.f32 %v474, %v562
      %v564 = vpop.f32.mrf.mxu0
      %565 = vmatprep.mubr.f32.mxu0 0.0
      %566 = vmatmul.mubr.f32.gmra.mxu0 %v450
      %v567 = vpop.f32.mrf.mxu0
      %v568 = vadd.f32 %v474, %v567
      %v569 = vpop.f32.mrf.mxu0
      %570 = vmatprep.mubr.f32.mxu0 0.0
      %571 = vmatmul.mubr.f32.gmra.mxu0 %v451
      %v572 = vpop.f32.mrf.mxu0
      %v573 = vadd.f32 %v474, %v572
      %v574 = vpop.f32.mrf.mxu0
      %575 = vmatprep.mubr.f32.mxu0 0.0
      %576 = vmatmul.mubr.f32.gmra.mxu0 %v452
      %v577 = vpop.f32.mrf.mxu0
      %v578 = vadd.f32 %v474, %v577
      %v579 = vpop.f32.mrf.mxu0
      %580 = vdwg.mxu0
      %vm581 = vcmp.gt.f32.partialorder %v543, 1.0
      %vm582 = vcmp.gt.f32.partialorder %v548, 1.0
      %vm583 = vcmp.gt.f32.partialorder %v553, 1.0
      %vm584 = vcmp.gt.f32.partialorder %v558, 1.0
      %vm585 = vcmp.gt.f32.partialorder %v563, 1.0
      %vm586 = vcmp.gt.f32.partialorder %v568, 1.0
      %vm587 = vcmp.gt.f32.partialorder %v573, 1.0
      %vm588 = vcmp.gt.f32.partialorder %v578, 1.0
      %v589 = vsel %vm581, 1, 0
      %v590 = vsel %vm582, 1, 0
      %v591 = vsel %vm583, 1, 0
      %v592 = vsel %vm584, 1, 0
      %v593 = vsel %vm585, 1, 0
      %v594 = vsel %vm586, 1, 0
      %v595 = vsel %vm587, 1, 0
      %v596 = vsel %vm588, 1, 0
      %v597 = vcvt.s32.f32 %v589
      %v598 = vcvt.s32.f32 %v590
      %v599 = vcvt.s32.f32 %v591
      %v600 = vcvt.s32.f32 %v592
      %v601 = vcvt.s32.f32 %v593
      %v602 = vcvt.s32.f32 %v594
      %v603 = vcvt.s32.f32 %v595
      %v604 = vcvt.s32.f32 %v596
      %v605 = vld [vmem:[%s5] sm:$0xff]
      %v606 = vld [vmem:[%s5 + $0x8] sm:$0xff]
      %v607 = vld [vmem:[%s5 + $0x10] sm:$0xff]
      %v608 = vld [vmem:[%s5 + $0x18] sm:$0xff]
      %v609 = vld [vmem:[%s5 + $0x20] sm:$0xff]
      %v610 = vld [vmem:[%s5 + $0x28] sm:$0xff]
      %v611 = vld [vmem:[%s5 + $0x30] sm:$0xff]
      %v612 = vld [vmem:[%s5 + $0x38] sm:$0xff]
      %v613 = vld [vmem:[%s6] sm:$0x1]
      %v615 = vlaneseq
      %v616 = vshrl.u32 %v615, 7
      %v617 = vsub.s32 0, %v616
      %v618 = vrot.slane %v613, %v617
      %vm620 = vcmask 523264
      %v622 = vsel %vm620, %v597, 0
      %v625 = vsel %vm620, %v598, 0
      %v628 = vsel %vm620, %v599, 0
      %v631 = vsel %vm620, %v600, 0
      %v634 = vsel %vm620, %v601, 0
      %v637 = vsel %vm620, %v602, 0
      %v640 = vsel %vm620, %v603, 0
      %v643 = vsel %vm620, %v604, 0
      %645 = vmatprep.subr.mxu0 0.0
      %646 = vmatpush1.msra.mxu0 0.0
      %647 = vmatprep.subr.mxu0 0.0
      %648 = vmatpush1.msra.mxu0 0.0
      %649 = vmatprep.subr.mxu0 0.0
      %650 = vmatpush1.msra.mxu0 0.0
      %651 = vmatprep.subr.mxu0 0.0
      %652 = vmatpush1.msra.mxu0 0.0
      %653 = vmatprep.subr.mxu0 0.0
      %654 = vmatpush1.msra.mxu0 0.0
      %655 = vmatprep.subr.mxu0 0.0
      %656 = vmatpush1.msra.mxu0 0.0
      %657 = vmatprep.subr.mxu0 0.0
      %658 = vmatpush1.msra.mxu0 0.0
      %659 = vmatprep.subr.mxu0 0.0
      %660 = vmatpush1.msra.mxu0 0.0
      %661 = vmatprep.subr.mxu0 0.0
      %662 = vmatpush1.msra.mxu0 %v612
      %663 = vmatprep.subr.mxu0 0.0
      %664 = vmatpush1.msra.mxu0 %v611
      %665 = vmatprep.subr.mxu0 0.0
      %666 = vmatpush1.msra.mxu0 %v610
      %667 = vmatprep.subr.mxu0 0.0
      %668 = vmatpush1.msra.mxu0 %v609
      %669 = vmatprep.subr.mxu0 0.0
      %670 = vmatpush1.msra.mxu0 %v608
      %671 = vmatprep.subr.mxu0 0.0
      %672 = vmatpush1.msra.mxu0 %v607
      %673 = vmatprep.subr.mxu0 0.0
      %674 = vmatpush1.msra.mxu0 %v606
      %675 = vmatprep.subr.mxu0 0.0
      %676 = vmatpush1.msra.mxu0 %v605
      %677 = vmatprep.subr.mxu0 0.0
      %678 = vmatpush2.msra.mxu0 0.0
      %679 = vmatprep.subr.mxu0 0.0
      %680 = vmatpush2.msra.mxu0 0.0
      %681 = vmatprep.subr.mxu0 0.0
      %682 = vmatpush2.msra.mxu0 0.0
      %683 = vmatprep.subr.mxu0 0.0
      %684 = vmatpush2.msra.mxu0 0.0
      %685 = vmatprep.subr.mxu0 0.0
      %686 = vmatpush2.msra.mxu0 0.0
      %687 = vmatprep.subr.mxu0 0.0
      %688 = vmatpush2.msra.mxu0 0.0
      %689 = vmatprep.subr.mxu0 0.0
      %690 = vmatpush2.msra.mxu0 0.0
      %691 = vmatprep.subr.mxu0 0.0
      %692 = vmatpush2.msra.mxu0 0.0
      %693 = vmatprep.subr.mxu0 0.0
      %694 = vmatpush2.msra.mxu0 0.0
      %695 = vmatprep.subr.mxu0 0.0
      %696 = vmatpush2.msra.mxu0 0.0
      %697 = vmatprep.subr.mxu0 0.0
      %698 = vmatpush2.msra.mxu0 0.0
      %699 = vmatprep.subr.mxu0 0.0
      %700 = vmatpush2.msra.mxu0 0.0
      %701 = vmatprep.subr.mxu0 0.0
      %702 = vmatpush2.msra.mxu0 0.0
      %703 = vmatprep.subr.mxu0 0.0
      %704 = vmatpush2.msra.mxu0 0.0
      %705 = vmatprep.subr.mxu0 0.0
      %706 = vmatpush2.msra.mxu0 0.0
      %707 = vmatprep.subr.mxu0 0.0
      %708 = vmatpush2.msra.mxu0 0.0
      %709 = vmatprep.mubr.f32.mxu0 0.0
      %710 = vmatmul.mubr.f32.gmra.mxu0 %v622
      %v711 = vpop.f32.mrf.mxu0
      %v712 = vadd.f32 %v618, %v711
      %v713 = vpop.f32.mrf.mxu0
      %714 = vmatprep.mubr.f32.mxu0 0.0
      %715 = vmatmul.mubr.f32.gmra.mxu0 %v625
      %v716 = vpop.f32.mrf.mxu0
      %v717 = vadd.f32 %v618, %v716
      %v718 = vpop.f32.mrf.mxu0
      %719 = vmatprep.mubr.f32.mxu0 0.0
      %720 = vmatmul.mubr.f32.gmra.mxu0 %v628
      %v721 = vpop.f32.mrf.mxu0
      %v722 = vadd.f32 %v618, %v721
      %v723 = vpop.f32.mrf.mxu0
      %724 = vmatprep.mubr.f32.mxu0 0.0
      %725 = vmatmul.mubr.f32.gmra.mxu0 %v631
      %v726 = vpop.f32.mrf.mxu0
      %v727 = vadd.f32 %v618, %v726
      %v728 = vpop.f32.mrf.mxu0
      %729 = vmatprep.mubr.f32.mxu0 0.0
      %730 = vmatmul.mubr.f32.gmra.mxu0 %v634
      %v731 = vpop.f32.mrf.mxu0
      %v732 = vadd.f32 %v618, %v731
      %v733 = vpop.f32.mrf.mxu0
      %734 = vmatprep.mubr.f32.mxu0 0.0
      %735 = vmatmul.mubr.f32.gmra.mxu0 %v637
      %v736 = vpop.f32.mrf.mxu0
      %v737 = vadd.f32 %v618, %v736
      %v738 = vpop.f32.mrf.mxu0
      %739 = vmatprep.mubr.f32.mxu0 0.0
      %740 = vmatmul.mubr.f32.gmra.mxu0 %v640
      %v741 = vpop.f32.mrf.mxu0
      %v742 = vadd.f32 %v618, %v741
      %v743 = vpop.f32.mrf.mxu0
      %744 = vmatprep.mubr.f32.mxu0 0.0
      %745 = vmatmul.mubr.f32.gmra.mxu0 %v643
      %v746 = vpop.f32.mrf.mxu0
      %v747 = vadd.f32 %v618, %v746
      %v748 = vpop.f32.mrf.mxu0
      %749 = vdwg.mxu0
      %vm750 = vcmask 15360
      %751 = vst.msk [vmem:[%s280] sm:$0xff] %vm750, %v712
      %752 = vst.msk [vmem:[%s280 + $0x8] sm:$0xff] %vm750, %v717
      %753 = vst.msk [vmem:[%s280 + $0x10] sm:$0xff] %vm750, %v722
      %754 = vst.msk [vmem:[%s280 + $0x18] sm:$0xff] %vm750, %v727
      %755 = vst.msk [vmem:[%s280 + $0x20] sm:$0xff] %vm750, %v732
      %756 = vst.msk [vmem:[%s280 + $0x28] sm:$0xff] %vm750, %v737
      %757 = vst.msk [vmem:[%s280 + $0x30] sm:$0xff] %vm750, %v742
      %758 = vst.msk [vmem:[%s280 + $0x38] sm:$0xff] %vm750, %v747
      %s759 = smul.u32 8, %s18
      %p760 = scmp.lt.s32.totalorder %s759, 31
      %s761 = scalar_select %p760, %s759, 31
      %s762 = smul.addr %s761, 8
      %s763 = scalar_lea.vmem %s7, %s762
      // Predicated region
      $region49: #{tpu_custom_call.1} parent=47 // pred_check
        %p764 = pneg %p188
      $region50: #{tpu_custom_call.1} parent=47 // pred_check_branch
        %766 = sbr.rel (%p764) target = $region52
      $region51: #{tpu_custom_call.1} parent=47 // pred_region
        %s767 = smul.u32 8, %s18
      $region52: #{tpu_custom_call.1} parent=47 // pred_fallthru
        _
    $region48: #{tpu_custom_call.1} parent=5 // pred_fallthru
      _
    %p768 = scmp.le.s32.totalorder 2, %s13
    // Predicated region
    $region53: #{tpu_custom_call.1} parent=5 // pred_check
      %p769 = pneg %p768
    $region54: #{tpu_custom_call.1} parent=5 // pred_check_branch
      %771 = sbr.rel (%p769) target = $region56
    $region55: #{tpu_custom_call.1} parent=5 // pred_region
      %s772 = ssub.s32 %s13, 2
      // Predicated region
      $region57: #{tpu_custom_call.1} parent=55 // pred_check
        %p773 = pneg %p194
      $region58: #{tpu_custom_call.1} parent=55 // pred_check_branch
        %775 = sbr.rel (%p773) target = $region60
      $region59: #{tpu_custom_call.1} parent=55 // pred_region
        %s776 = smul.u32 8, %s19
        %p777 = scmp.lt.s32.totalorder %s776, 31
        %s778 = scalar_select %p777, %s776, 31
        %s779 = smul.addr %s778, 8
        %s780 = scalar_lea.vmem %s7, %s779
      $region60: #{tpu_custom_call.1} parent=55 // pred_fallthru
        _
    $region56: #{tpu_custom_call.1} parent=5 // pred_fallthru
      _
  $region6: #{tpu_custom_call.1} parent=0 // loop_footer
    %s17 = sadd.s32 1, %s13
  $region7: #{tpu_custom_call.1} parent=0 // loop_footer_branch
    %12 = sbr.rel target = $region3
  $region8: #{tpu_custom_call.1} parent=0 // loop_exit
    _

</llo_original>
